<compile_context>
chip_gen: v7x
topology: tpu7x:2x2x1
jax: 0.10.0
libtpu: 0.0.40
codegen_flags: <defaults>
</compile_context>

<pallas_src>
import functools

import jax
import jax.numpy as jnp
from jax.experimental import pallas as pl
from jax.experimental.pallas import tpu as pltpu

NEG_SLOPE = 0.01  # PyTorch LeakyReLU default
HIDDEN = 128      # hardcoded in the PyTorch module


def _round_up(x, m):
    return ((x + m - 1) // m) * m


def _leaky_relu(x):
    return jnp.where(x > 0, x, NEG_SLOPE * x)


def mlp_kernel(x_ref, w1_ref, b1_ref, w2_ref, b2_ref, w3_ref, b3_ref, o_ref):
    # fc1 + LeakyReLU  (bf16 MXU operands, f32 accumulate, f32 elementwise)
    h = jnp.dot(x_ref[...].astype(jnp.bfloat16), w1_ref[...],
                preferred_element_type=jnp.float32)
    h = _leaky_relu(h + b1_ref[...])
    # fc2 + LeakyReLU
    h = jnp.dot(h.astype(jnp.bfloat16), w2_ref[...],
                preferred_element_type=jnp.float32)
    h = _leaky_relu(h + b2_ref[...])
    # fc3 (no activation), lane-dense padded output
    o = jnp.dot(h.astype(jnp.bfloat16), w3_ref[...],
                preferred_element_type=jnp.float32)
    o_ref[...] = (o + b3_ref[...]).astype(o_ref.dtype)


@functools.partial(jax.jit, static_argnames=("block_b",))
def simple_deep_classifier(x, params, *, block_b=1024):
    """x: (B, input_dim) float32. params: dict of (in,out) f32 weights / (1,out) f32 biases."""
    w1, b1, w2, b2, w3, b3 = (
        params["w1"], params["b1"],
        params["w2"], params["b2"],
        params["w3"], params["b3"],
    )
    B, d_in = x.shape
    H = w1.shape[1]
    out_dim = w3.shape[1]

    # --- lane-dense output: pad out_dim to a multiple of 128 (zero cols/bias) ---
    out_pad = _round_up(out_dim, 128)
    if out_pad != out_dim:
        w3 = jnp.pad(w3, ((0, 0), (0, out_pad - out_dim)))
        b3 = jnp.pad(b3, ((0, 0), (0, out_pad - out_dim)))

    # --- bf16 MXU operands (accumulation stays f32 inside the kernel) ---
    w1b = w1.astype(jnp.bfloat16)
    w2b = w2.astype(jnp.bfloat16)
    w3b = w3.astype(jnp.bfloat16)

    # --- batch tile: up to block_b rows, multiple of 8 sublanes; pad batch ---
    tb = min(block_b, _round_up(B, 8))
    b_pad = _round_up(B, tb)
    if b_pad != B:
        x = jnp.pad(x, ((0, b_pad - B), (0, 0)))
    grid = (b_pad // tb,)

    flops = 2 * b_pad * (d_in * H + H * H + H * out_pad)
    bytes_accessed = (
        4 * b_pad * d_in            # x stream (f32)
        + 4 * b_pad * out_pad       # output stream (f32)
        + 2 * (d_in * H + H * H + H * out_pad)  # bf16 weights (resident, read once)
        + 4 * (H + H + out_pad)     # f32 biases
    )

    out = pl.pallas_call(
        mlp_kernel,
        out_shape=jax.ShapeDtypeStruct((b_pad, out_pad), jnp.float32),
        grid=grid,
        in_specs=[
            pl.BlockSpec((tb, d_in), lambda i: (i, 0)),        # x: streamed per step
            pl.BlockSpec((d_in, H), lambda i: (0, 0)),         # w1: resident
            pl.BlockSpec((1, H), lambda i: (0, 0)),            # b1: resident
            pl.BlockSpec((H, H), lambda i: (0, 0)),            # w2: resident
            pl.BlockSpec((1, H), lambda i: (0, 0)),            # b2: resident
            pl.BlockSpec((H, out_pad), lambda i: (0, 0)),      # w3: resident
            pl.BlockSpec((1, out_pad), lambda i: (0, 0)),      # b3: resident
        ],
        out_specs=pl.BlockSpec((tb, out_pad), lambda i: (i, 0)),
        compiler_params=pltpu.CompilerParams(
            dimension_semantics=("parallel",),      # megacore-shard batch on v7x
            vmem_limit_bytes=32 * 1024 * 1024,      # fits v7x's 64 MiB physical VMEM
        ),
        cost_estimate=pl.CostEstimate(
            flops=flops, transcendentals=0, bytes_accessed=bytes_accessed),
    )(x, w1b, b1, w2b, b2, w3b, b3)

    return out[:B, :out_dim]


def init_params(key, input_dim, output_dim, hidden=HIDDEN):
    """Deterministic init mimicking nn.Linear's uniform(-1/sqrt(fan_in), 1/sqrt(fan_in))."""
    ks = jax.random.split(key, 6)

    def lin(kw, kb, fan_in, fan_out):
        bound = 1.0 / jnp.sqrt(fan_in)
        w = jax.random.uniform(kw, (fan_in, fan_out), jnp.float32, -bound, bound)
        b = jax.random.uniform(kb, (1, fan_out), jnp.float32, -bound, bound)
        return w, b

    w1, b1 = lin(ks[0], ks[1], input_dim, hidden)
    w2, b2 = lin(ks[2], ks[3], hidden, hidden)
    w3, b3 = lin(ks[4], ks[5], hidden, output_dim)
    return {"w1": w1, "b1": b1, "w2": w2, "b2": b2, "w3": w3, "b3": b3}


def reference(x, p):
    h = _leaky_relu(x @ p["w1"] + p["b1"])
    h = _leaky_relu(h @ p["w2"] + p["b2"])
    return h @ p["w3"] + p["b3"]


if __name__ == "__main__":
    key = jax.random.PRNGKey(0)
    k_x, k_p = jax.random.split(key)

    batch, input_dim, output_dim = 8, 32, 16
    x = jax.random.normal(k_x, (batch, input_dim), jnp.float32)
    params = init_params(k_p, input_dim, output_dim)

    out = simple_deep_classifier(x, params)
    out = jax.block_until_ready(out)

    ref = reference(x, params)
    assert out.shape == (batch, output_dim)
    # bf16 MXU operands (f32 accumulation) -> relaxed tolerance vs f32 reference.
    assert jnp.allclose(out, ref, atol=3e-2, rtol=3e-2), "mismatch vs reference"

    print("KERNEL_OK")
</pallas_src>

<mosaic_0001>
module attributes {stable_mosaic.version = 11 : i64} {
  func.func @mlp_kernel(%arg0: i32, %arg1: memref<8x32xf32, #tpu.memory_space<vmem>>, %arg2: memref<32x128xbf16, #tpu.memory_space<vmem>>, %arg3: memref<1x128xf32, #tpu.memory_space<vmem>>, %arg4: memref<128x128xbf16, #tpu.memory_space<vmem>>, %arg5: memref<1x128xf32, #tpu.memory_space<vmem>>, %arg6: memref<128x128xbf16, #tpu.memory_space<vmem>>, %arg7: memref<1x128xf32, #tpu.memory_space<vmem>>, %arg8: memref<8x128xf32, #tpu.memory_space<vmem>>) attributes {dimension_semantics = [#tpu.dimension_semantics<parallel>], iteration_bounds = array<i64: 1>, scalar_prefetch = 0 : i64, scratch_operands = 0 : i64, tpu.core_type = #tpu.core_type<tc>, window_params = [{transform_indices = @transform_0, window_bounds = array<i64: 8, 32>}, {pipeline_mode = #tpu.pipeline_mode<synchronous>, transform_indices = @transform_1, window_bounds = array<i64: 32, 128>}, {pipeline_mode = #tpu.pipeline_mode<synchronous>, transform_indices = @transform_2, window_bounds = array<i64: 1, 128>}, {pipeline_mode = #tpu.pipeline_mode<synchronous>, transform_indices = @transform_3, window_bounds = array<i64: 128, 128>}, {pipeline_mode = #tpu.pipeline_mode<synchronous>, transform_indices = @transform_4, window_bounds = array<i64: 1, 128>}, {pipeline_mode = #tpu.pipeline_mode<synchronous>, transform_indices = @transform_5, window_bounds = array<i64: 128, 128>}, {pipeline_mode = #tpu.pipeline_mode<synchronous>, transform_indices = @transform_6, window_bounds = array<i64: 1, 128>}, {transform_indices = @transform_7, window_bounds = array<i64: 8, 128>}]} {
    %c0 = arith.constant 0 : index
    %c0_0 = arith.constant 0 : index
    %0 = vector.load %arg1[%c0, %c0_0] : memref<8x32xf32, #tpu.memory_space<vmem>>, vector<8x32xf32>
    %1 = arith.truncf %0 : vector<8x32xf32> to vector<8x32xbf16>
    %c0_1 = arith.constant 0 : index
    %c0_2 = arith.constant 0 : index
    %2 = vector.load %arg2[%c0_1, %c0_2] : memref<32x128xbf16, #tpu.memory_space<vmem>>, vector<32x128xbf16>
    %cst = arith.constant dense<0.000000e+00> : vector<8x128xf32>
    %3 = tpu.matmul %1, %2, %cst {dimension_numbers = #tpu.dot_dimension_numbers<[1], [0], [0], [1], [0, 0, 1, 1], [], []>} : vector<8x32xbf16>, vector<32x128xbf16>, vector<8x128xf32> -> vector<8x128xf32>
    %c0_3 = arith.constant 0 : index
    %c0_4 = arith.constant 0 : index
    %4 = vector.load %arg3[%c0_3, %c0_4] : memref<1x128xf32, #tpu.memory_space<vmem>>, vector<1x128xf32>
    %5 = vector.broadcast %4 : vector<1x128xf32> to vector<8x128xf32>
    %6 = arith.addf %3, %5 : vector<8x128xf32>
    %cst_5 = arith.constant 0.000000e+00 : f32
    %7 = vector.broadcast %cst_5 : f32 to vector<8x128xf32>
    %8 = arith.cmpf ogt, %6, %7 : vector<8x128xf32>
    %cst_6 = arith.constant 0.00999999977 : f32
    %9 = vector.broadcast %cst_6 : f32 to vector<8x128xf32>
    %10 = arith.mulf %9, %6 : vector<8x128xf32>
    %11 = arith.select %8, %6, %10 : vector<8x128xi1>, vector<8x128xf32>
    %12 = arith.truncf %11 : vector<8x128xf32> to vector<8x128xbf16>
    %c0_7 = arith.constant 0 : index
    %c0_8 = arith.constant 0 : index
    %13 = vector.load %arg4[%c0_7, %c0_8] : memref<128x128xbf16, #tpu.memory_space<vmem>>, vector<128x128xbf16>
    %cst_9 = arith.constant dense<0.000000e+00> : vector<8x128xf32>
    %14 = tpu.matmul %12, %13, %cst_9 {dimension_numbers = #tpu.dot_dimension_numbers<[1], [0], [0], [1], [0, 0, 1, 1], [], []>} : vector<8x128xbf16>, vector<128x128xbf16>, vector<8x128xf32> -> vector<8x128xf32>
    %c0_10 = arith.constant 0 : index
    %c0_11 = arith.constant 0 : index
    %15 = vector.load %arg5[%c0_10, %c0_11] : memref<1x128xf32, #tpu.memory_space<vmem>>, vector<1x128xf32>
    %16 = vector.broadcast %15 : vector<1x128xf32> to vector<8x128xf32>
    %17 = arith.addf %14, %16 : vector<8x128xf32>
    %cst_12 = arith.constant 0.000000e+00 : f32
    %18 = vector.broadcast %cst_12 : f32 to vector<8x128xf32>
    %19 = arith.cmpf ogt, %17, %18 : vector<8x128xf32>
    %cst_13 = arith.constant 0.00999999977 : f32
    %20 = vector.broadcast %cst_13 : f32 to vector<8x128xf32>
    %21 = arith.mulf %20, %17 : vector<8x128xf32>
    %22 = arith.select %19, %17, %21 : vector<8x128xi1>, vector<8x128xf32>
    %23 = arith.truncf %22 : vector<8x128xf32> to vector<8x128xbf16>
    %c0_14 = arith.constant 0 : index
    %c0_15 = arith.constant 0 : index
    %24 = vector.load %arg6[%c0_14, %c0_15] : memref<128x128xbf16, #tpu.memory_space<vmem>>, vector<128x128xbf16>
    %cst_16 = arith.constant dense<0.000000e+00> : vector<8x128xf32>
    %25 = tpu.matmul %23, %24, %cst_16 {dimension_numbers = #tpu.dot_dimension_numbers<[1], [0], [0], [1], [0, 0, 1, 1], [], []>} : vector<8x128xbf16>, vector<128x128xbf16>, vector<8x128xf32> -> vector<8x128xf32>
    %c0_17 = arith.constant 0 : index
    %c0_18 = arith.constant 0 : index
    %26 = vector.load %arg7[%c0_17, %c0_18] : memref<1x128xf32, #tpu.memory_space<vmem>>, vector<1x128xf32>
    %27 = vector.broadcast %26 : vector<1x128xf32> to vector<8x128xf32>
    %28 = arith.addf %25, %27 : vector<8x128xf32>
    %c0_19 = arith.constant 0 : index
    %c0_20 = arith.constant 0 : index
    %29 = vector.load %arg8[%c0_19, %c0_20] : memref<8x128xf32, #tpu.memory_space<vmem>>, vector<8x128xf32>
    tpu.vector_store %arg8[%c0_19, %c0_20], %28 {strides = array<i32>} : memref<8x128xf32, #tpu.memory_space<vmem>>, vector<8x128xf32>,
    return
  }
  func.func @transform_0(%arg0: i32) -> (i32, i32) {
    %c0_i32 = arith.constant 0 : i32
    %c0_i32_0 = arith.constant 0 : i32
    return %arg0, %c0_i32 : i32, i32
  }
  func.func @transform_1(%arg0: i32) -> (i32, i32) {
    %c0_i32 = arith.constant 0 : i32
    %c0_i32_0 = arith.constant 0 : i32
    %c0_i32_1 = arith.constant 0 : i32
    return %c0_i32, %c0_i32_0 : i32, i32
  }
  func.func @transform_2(%arg0: i32) -> (i32, i32) {
    %c0_i32 = arith.constant 0 : i32
    %c0_i32_0 = arith.constant 0 : i32
    %c0_i32_1 = arith.constant 0 : i32
    return %c0_i32, %c0_i32_0 : i32, i32
  }
  func.func @transform_3(%arg0: i32) -> (i32, i32) {
    %c0_i32 = arith.constant 0 : i32
    %c0_i32_0 = arith.constant 0 : i32
    %c0_i32_1 = arith.constant 0 : i32
    return %c0_i32, %c0_i32_0 : i32, i32
  }
  func.func @transform_4(%arg0: i32) -> (i32, i32) {
    %c0_i32 = arith.constant 0 : i32
    %c0_i32_0 = arith.constant 0 : i32
    %c0_i32_1 = arith.constant 0 : i32
    return %c0_i32, %c0_i32_0 : i32, i32
  }
  func.func @transform_5(%arg0: i32) -> (i32, i32) {
    %c0_i32 = arith.constant 0 : i32
    %c0_i32_0 = arith.constant 0 : i32
    %c0_i32_1 = arith.constant 0 : i32
    return %c0_i32, %c0_i32_0 : i32, i32
  }
  func.func @transform_6(%arg0: i32) -> (i32, i32) {
    %c0_i32 = arith.constant 0 : i32
    %c0_i32_0 = arith.constant 0 : i32
    %c0_i32_1 = arith.constant 0 : i32
    return %c0_i32, %c0_i32_0 : i32, i32
  }
  func.func @transform_7(%arg0: i32) -> (i32, i32) {
    %c0_i32 = arith.constant 0 : i32
    %c0_i32_0 = arith.constant 0 : i32
    return %arg0, %c0_i32 : i32, i32
  }
}

</mosaic_0001>

<llo_original>
// kernel: simple_deep_classifier.1
$region0: #{simple_deep_classifier.1}
  #allocation0 [shape = 'u32[]', space=smem, size = 0x4, offset = 0x4, fixed_abs, tag = 'smem constant byte address 0x4 - core index']
  #allocation1 [shape = 'u32[144,128]{1,0:T(1,128)}', space=vmem, size = 0x12000, scoped, tag = 'internal scratch']
  %s0 = inlined_call_operand.vmem [shape: f32[8,32], index: 0, kind: input, shape index: {}]
  %s1 = inlined_call_operand.vmem [shape: bf16[32,128], index: 1, kind: input, shape index: {}]
  %s2 = inlined_call_operand.vmem [shape: f32[1,128], index: 2, kind: input, shape index: {}]
  %s3 = inlined_call_operand.vmem [shape: bf16[128,128], index: 3, kind: input, shape index: {}]
  %s4 = inlined_call_operand.vmem [shape: f32[1,128], index: 4, kind: input, shape index: {}]
  %s5 = inlined_call_operand.vmem [shape: bf16[128,128], index: 5, kind: input, shape index: {}]
  %s6 = inlined_call_operand.vmem [shape: f32[1,128], index: 6, kind: input, shape index: {}]
  %s7 = inlined_call_operand.hbm [shape: f32[8,128], index: 7, kind: output, shape index: {}]
  %s8 = sld [smem:[#allocation0]]
  $region38: #{simple_deep_classifier.1} parent=0
    _
  %s10 = ssub.s32 1, %s8
  %s11 = scalar_select 0, %s10, %s8
  $region1: #{simple_deep_classifier.1} parent=0
    #allocation2 [shape = 'u8[4096]{0}', space=vmem, size = 0x1000, scoped, tag = 'output window, operand 0, single buffered']
    #allocation3 [shape = 's32[1]{0}', space=sflag, size = 0x4, scoped, tag = 'scoped memory for simple_deep_classifier.1']
    %12 = vsyncpa [#allocation3], 0
    // Predicated region
    $region2: #{simple_deep_classifier.1} parent=1 // pred_check
      _
    $region3: #{simple_deep_classifier.1} parent=1 // pred_check_branch
      %14 = sbr.rel (0) target = $region5
    $region4: #{simple_deep_classifier.1} parent=1 // pred_region
      _
    $region5: #{simple_deep_classifier.1} parent=1 // pred_fallthru
      _
    // Predicated region
    $region6: #{simple_deep_classifier.1} parent=1 // pred_check
      _
    $region7: #{simple_deep_classifier.1} parent=1 // pred_check_branch
      %16 = sbr.rel (0) target = $region9
    $region8: #{simple_deep_classifier.1} parent=1 // pred_region
      _
    $region9: #{simple_deep_classifier.1} parent=1 // pred_fallthru
      _
    // Predicated region
    $region10: #{simple_deep_classifier.1} parent=1 // pred_check
      _
    $region11: #{simple_deep_classifier.1} parent=1 // pred_check_branch
      %18 = sbr.rel (0) target = $region13
    $region12: #{simple_deep_classifier.1} parent=1 // pred_region
      _
    $region13: #{simple_deep_classifier.1} parent=1 // pred_fallthru
      _
    // Predicated region
    $region14: #{simple_deep_classifier.1} parent=1 // pred_check
      _
    $region15: #{simple_deep_classifier.1} parent=1 // pred_check_branch
      %20 = sbr.rel (0) target = $region17
    $region16: #{simple_deep_classifier.1} parent=1 // pred_region
      _
    $region17: #{simple_deep_classifier.1} parent=1 // pred_fallthru
      _
    // Predicated region
    $region18: #{simple_deep_classifier.1} parent=1 // pred_check
      _
    $region19: #{simple_deep_classifier.1} parent=1 // pred_check_branch
      %22 = sbr.rel (0) target = $region21
    $region20: #{simple_deep_classifier.1} parent=1 // pred_region
      _
    $region21: #{simple_deep_classifier.1} parent=1 // pred_fallthru
      _
    // Predicated region
    $region22: #{simple_deep_classifier.1} parent=1 // pred_check
      _
    $region23: #{simple_deep_classifier.1} parent=1 // pred_check_branch
      %24 = sbr.rel (0) target = $region25
    $region24: #{simple_deep_classifier.1} parent=1 // pred_region
      _
    $region25: #{simple_deep_classifier.1} parent=1 // pred_fallthru
      _
    // Predicated region
    $region26: #{simple_deep_classifier.1} parent=1 // pred_check
      _
    $region27: #{simple_deep_classifier.1} parent=1 // pred_check_branch
      %26 = sbr.rel (0) target = $region29
    $region28: #{simple_deep_classifier.1} parent=1 // pred_region
      _
    $region29: #{simple_deep_classifier.1} parent=1 // pred_fallthru
      _
    %v28 = vld [vmem:[%s0] sm:$0xff]
    %v29 = vpack.c.bf16 %v28, %v28
    %v30 = vld [vmem:[%s1] sm:$0xf]
    %v31 = vld [vmem:[%s1 + $0x4] sm:$0xf]
    %v32 = vld [vmem:[%s1 + $0x8] sm:$0xf]
    %v33 = vld [vmem:[%s1 + $0xc] sm:$0xf]
    %v34 = vld [vmem:[%s2] sm:$0x1]
    %v36 = vlaneseq
    %v37 = vshrl.u32 %v36, 7
    %v38 = vsub.s32 0, %v37
    %v39 = vrot.slane %v34, %v38
    %v45 = vunpack.c.l.b16 %v30
    %v46 = vunpack.c.l.b16 %v31
    %v47 = vunpack.c.l.b16 %v32
    %v48 = vunpack.c.l.b16 %v33
    %v49 = vpack.c.b16 %v46, %v45
    %v50 = vpack.c.b16 %v48, %v47
    %vm53 = vcmask 261120
    %v55 = vsel %vm53, %v29, 0
    %57 = vmatprep.subr.bf16.mxu0 0
    %58 = vmatpush1.bf16.msra.mxu0 %v49
    %59 = vmatprep.subr.bf16.mxu0 0
    %60 = vmatpush1.bf16.msra.mxu0 %v50
    %61 = vmatprep.subr.bf16.mxu0 0
    %62 = vmatpush1.bf16.msra.mxu0 0
    %63 = vmatprep.subr.bf16.mxu0 0
    %64 = vmatpush1.bf16.msra.mxu0 0
    %65 = vmatprep.subr.bf16.mxu0 0
    %66 = vmatpush1.bf16.msra.mxu0 0
    %67 = vmatprep.subr.bf16.mxu0 0
    %68 = vmatpush1.bf16.msra.mxu0 0
    %69 = vmatprep.subr.bf16.mxu0 0
    %70 = vmatpush1.bf16.msra.mxu0 0
    %71 = vmatprep.subr.bf16.mxu0 0
    %72 = vmatpush1.bf16.msra.mxu0 0
    %73 = vmatprep.subr.bf16.mxu0 0
    %74 = vmatpush1.bf16.msra.mxu0 0
    %75 = vmatprep.subr.bf16.mxu0 0
    %76 = vmatpush1.bf16.msra.mxu0 0
    %77 = vmatprep.subr.bf16.mxu0 0
    %78 = vmatpush1.bf16.msra.mxu0 0
    %79 = vmatprep.subr.bf16.mxu0 0
    %80 = vmatpush1.bf16.msra.mxu0 0
    %81 = vmatprep.subr.bf16.mxu0 0
    %82 = vmatpush1.bf16.msra.mxu0 0
    %83 = vmatprep.subr.bf16.mxu0 0
    %84 = vmatpush1.bf16.msra.mxu0 0
    %85 = vmatprep.subr.bf16.mxu0 0
    %86 = vmatpush1.bf16.msra.mxu0 0
    %87 = vmatprep.subr.bf16.mxu0 0
    %88 = vmatpush1.bf16.msra.mxu0 0
    %89 = vmatprep.mubr.bf16.mxu0 0
    %90 = vmatmul.mubr.bf16.gmra.mrb[0].mxu0 %v55
    %v91 = vpop.f32.mrb[0].mxu0
    %v92 = vadd.f32 %v39, %v91
    %v93 = vpop.f32.mrb[0].mxu0
    %v94 = vpop.f32.mrb[0].mxu0
    %v95 = vpop.f32.mrb[0].mxu0
    %96 = vdwg.mxu0
    %vm97 = vcmp.gt.f32.partialorder %v92, 0.0
    %v98 = vmul.f32 %v92, 0.01
    %v99 = vsel %vm97, %v92, %v98
    %v100 = vpack.c.bf16 %v99, %v99
    %v101 = vld [vmem:[%s3] sm:$0xf]
    %v102 = vld [vmem:[%s3 + $0x4] sm:$0xf]
    %v103 = vld [vmem:[%s3 + $0x8] sm:$0xf]
    %v104 = vld [vmem:[%s3 + $0xc] sm:$0xf]
    %v105 = vld [vmem:[%s3 + $0x10] sm:$0xf]
    %v106 = vld [vmem:[%s3 + $0x14] sm:$0xf]
    %v107 = vld [vmem:[%s3 + $0x18] sm:$0xf]
    %v108 = vld [vmem:[%s3 + $0x1c] sm:$0xf]
    %v109 = vld [vmem:[%s3 + $0x20] sm:$0xf]
    %v110 = vld [vmem:[%s3 + $0x24] sm:$0xf]
    %v111 = vld [vmem:[%s3 + $0x28] sm:$0xf]
    %v112 = vld [vmem:[%s3 + $0x2c] sm:$0xf]
    %v113 = vld [vmem:[%s3 + $0x30] sm:$0xf]
    %v114 = vld [vmem:[%s3 + $0x34] sm:$0xf]
    %v115 = vld [vmem:[%s3 + $0x38] sm:$0xf]
    %v116 = vld [vmem:[%s3 + $0x3c] sm:$0xf]
    %v117 = vld [vmem:[%s4] sm:$0x1]
    %v119 = vlaneseq
    %v120 = vshrl.u32 %v119, 7
    %v121 = vsub.s32 0, %v120
    %v122 = vrot.slane %v117, %v121
    %v140 = vunpack.c.l.b16 %v101
    %v141 = vunpack.c.l.b16 %v102
    %v142 = vunpack.c.l.b16 %v103
    %v143 = vunpack.c.l.b16 %v104
    %v144 = vunpack.c.l.b16 %v105
    %v145 = vunpack.c.l.b16 %v106
    %v146 = vunpack.c.l.b16 %v107
    %v147 = vunpack.c.l.b16 %v108
    %v148 = vunpack.c.l.b16 %v109
    %v149 = vunpack.c.l.b16 %v110
    %v150 = vunpack.c.l.b16 %v111
    %v151 = vunpack.c.l.b16 %v112
    %v152 = vunpack.c.l.b16 %v113
    %v153 = vunpack.c.l.b16 %v114
    %v154 = vunpack.c.l.b16 %v115
    %v155 = vunpack.c.l.b16 %v116
    %v156 = vpack.c.b16 %v141, %v140
    %v157 = vpack.c.b16 %v143, %v142
    %v158 = vpack.c.b16 %v145, %v144
    %v159 = vpack.c.b16 %v147, %v146
    %v160 = vpack.c.b16 %v149, %v148
    %v161 = vpack.c.b16 %v151, %v150
    %v162 = vpack.c.b16 %v153, %v152
    %v163 = vpack.c.b16 %v155, %v154
    %172 = vmatprep.subr.bf16.mxu0 0
    %173 = vmatpush1.bf16.msra.mxu0 %v156
    %174 = vmatprep.subr.bf16.mxu0 0
    %175 = vmatpush1.bf16.msra.mxu0 %v157
    %176 = vmatprep.subr.bf16.mxu0 0
    %177 = vmatpush1.bf16.msra.mxu0 %v158
    %178 = vmatprep.subr.bf16.mxu0 0
    %179 = vmatpush1.bf16.msra.mxu0 %v159
    %180 = vmatprep.subr.bf16.mxu0 0
    %181 = vmatpush1.bf16.msra.mxu0 %v160
    %182 = vmatprep.subr.bf16.mxu0 0
    %183 = vmatpush1.bf16.msra.mxu0 %v161
    %184 = vmatprep.subr.bf16.mxu0 0
    %185 = vmatpush1.bf16.msra.mxu0 %v162
    %186 = vmatprep.subr.bf16.mxu0 0
    %187 = vmatpush1.bf16.msra.mxu0 %v163
    %188 = vmatprep.subr.bf16.mxu0 0
    %189 = vmatpush1.bf16.msra.mxu0 0
    %190 = vmatprep.subr.bf16.mxu0 0
    %191 = vmatpush1.bf16.msra.mxu0 0
    %192 = vmatprep.subr.bf16.mxu0 0
    %193 = vmatpush1.bf16.msra.mxu0 0
    %194 = vmatprep.subr.bf16.mxu0 0
    %195 = vmatpush1.bf16.msra.mxu0 0
    %196 = vmatprep.subr.bf16.mxu0 0
    %197 = vmatpush1.bf16.msra.mxu0 0
    %198 = vmatprep.subr.bf16.mxu0 0
    %199 = vmatpush1.bf16.msra.mxu0 0
    %200 = vmatprep.subr.bf16.mxu0 0
    %201 = vmatpush1.bf16.msra.mxu0 0
    %202 = vmatprep.subr.bf16.mxu0 0
    %203 = vmatpush1.bf16.msra.mxu0 0
    %204 = vmatprep.mubr.bf16.mxu0 0
    %205 = vmatmul.mubr.bf16.gmra.mrb[0].mxu0 %v100
    %v206 = vpop.f32.mrb[0].mxu0
    %v207 = vadd.f32 %v122, %v206
    %v208 = vpop.f32.mrb[0].mxu0
    %v209 = vpop.f32.mrb[0].mxu0
    %v210 = vpop.f32.mrb[0].mxu0
    %211 = vdwg.mxu0
    %vm212 = vcmp.gt.f32.partialorder %v207, 0.0
    %v213 = vmul.f32 %v207, 0.01
    %v214 = vsel %vm212, %v207, %v213
    %v215 = vpack.c.bf16 %v214, %v214
    %v216 = vld [vmem:[%s5] sm:$0xf]
    %v217 = vld [vmem:[%s5 + $0x4] sm:$0xf]
    %v218 = vld [vmem:[%s5 + $0x8] sm:$0xf]
    %v219 = vld [vmem:[%s5 + $0xc] sm:$0xf]
    %v220 = vld [vmem:[%s5 + $0x10] sm:$0xf]
    %v221 = vld [vmem:[%s5 + $0x14] sm:$0xf]
    %v222 = vld [vmem:[%s5 + $0x18] sm:$0xf]
    %v223 = vld [vmem:[%s5 + $0x1c] sm:$0xf]
    %v224 = vld [vmem:[%s5 + $0x20] sm:$0xf]
    %v225 = vld [vmem:[%s5 + $0x24] sm:$0xf]
    %v226 = vld [vmem:[%s5 + $0x28] sm:$0xf]
    %v227 = vld [vmem:[%s5 + $0x2c] sm:$0xf]
    %v228 = vld [vmem:[%s5 + $0x30] sm:$0xf]
    %v229 = vld [vmem:[%s5 + $0x34] sm:$0xf]
    %v230 = vld [vmem:[%s5 + $0x38] sm:$0xf]
    %v231 = vld [vmem:[%s5 + $0x3c] sm:$0xf]
    %v232 = vld [vmem:[%s6] sm:$0x1]
    %v234 = vlaneseq
    %v235 = vshrl.u32 %v234, 7
    %v236 = vsub.s32 0, %v235
    %v237 = vrot.slane %v232, %v236
    %v255 = vunpack.c.l.b16 %v216
    %v256 = vunpack.c.l.b16 %v217
    %v257 = vunpack.c.l.b16 %v218
    %v258 = vunpack.c.l.b16 %v219
    %v259 = vunpack.c.l.b16 %v220
    %v260 = vunpack.c.l.b16 %v221
    %v261 = vunpack.c.l.b16 %v222
    %v262 = vunpack.c.l.b16 %v223
    %v263 = vunpack.c.l.b16 %v224
    %v264 = vunpack.c.l.b16 %v225
    %v265 = vunpack.c.l.b16 %v226
    %v266 = vunpack.c.l.b16 %v227
    %v267 = vunpack.c.l.b16 %v228
    %v268 = vunpack.c.l.b16 %v229
    %v269 = vunpack.c.l.b16 %v230
    %v270 = vunpack.c.l.b16 %v231
    %v271 = vpack.c.b16 %v256, %v255
    %v272 = vpack.c.b16 %v258, %v257
    %v273 = vpack.c.b16 %v260, %v259
    %v274 = vpack.c.b16 %v262, %v261
    %v275 = vpack.c.b16 %v264, %v263
    %v276 = vpack.c.b16 %v266, %v265
    %v277 = vpack.c.b16 %v268, %v267
    %v278 = vpack.c.b16 %v270, %v269
    %287 = vmatprep.subr.bf16.mxu0 0
    %288 = vmatpush1.bf16.msra.mxu0 %v271
    %289 = vmatprep.subr.bf16.mxu0 0
    %290 = vmatpush1.bf16.msra.mxu0 %v272
    %291 = vmatprep.subr.bf16.mxu0 0
    %292 = vmatpush1.bf16.msra.mxu0 %v273
    %293 = vmatprep.subr.bf16.mxu0 0
    %294 = vmatpush1.bf16.msra.mxu0 %v274
    %295 = vmatprep.subr.bf16.mxu0 0
    %296 = vmatpush1.bf16.msra.mxu0 %v275
    %297 = vmatprep.subr.bf16.mxu0 0
    %298 = vmatpush1.bf16.msra.mxu0 %v276
    %299 = vmatprep.subr.bf16.mxu0 0
    %300 = vmatpush1.bf16.msra.mxu0 %v277
    %301 = vmatprep.subr.bf16.mxu0 0
    %302 = vmatpush1.bf16.msra.mxu0 %v278
    %303 = vmatprep.subr.bf16.mxu0 0
    %304 = vmatpush1.bf16.msra.mxu0 0
    %305 = vmatprep.subr.bf16.mxu0 0
    %306 = vmatpush1.bf16.msra.mxu0 0
    %307 = vmatprep.subr.bf16.mxu0 0
    %308 = vmatpush1.bf16.msra.mxu0 0
    %309 = vmatprep.subr.bf16.mxu0 0
    %310 = vmatpush1.bf16.msra.mxu0 0
    %311 = vmatprep.subr.bf16.mxu0 0
    %312 = vmatpush1.bf16.msra.mxu0 0
    %313 = vmatprep.subr.bf16.mxu0 0
    %314 = vmatpush1.bf16.msra.mxu0 0
    %315 = vmatprep.subr.bf16.mxu0 0
    %316 = vmatpush1.bf16.msra.mxu0 0
    %317 = vmatprep.subr.bf16.mxu0 0
    %318 = vmatpush1.bf16.msra.mxu0 0
    %319 = vmatprep.mubr.bf16.mxu0 0
    %320 = vmatmul.mubr.bf16.gmra.mrb[0].mxu0 %v215
    %v321 = vpop.f32.mrb[0].mxu0
    %v322 = vadd.f32 %v237, %v321
    %v323 = vpop.f32.mrb[0].mxu0
    %v324 = vpop.f32.mrb[0].mxu0
    %v325 = vpop.f32.mrb[0].mxu0
    %326 = vdwg.mxu0
    %327 = vst [vmem:[#allocation2] sm:$0xff] %v322
    // Predicated region
    $region30: #{simple_deep_classifier.1} parent=1 // pred_check
      _
    $region31: #{simple_deep_classifier.1} parent=1 // pred_check_branch
      %329 = sbr.rel (0) target = $region33
    $region32: #{simple_deep_classifier.1} parent=1 // pred_region
      %s331 = ssub.s32 128, 128
      %332 = vsyncadd [#allocation3], %s331
      %s334 = sshll.u32 [#allocation2], 4
      %s335 = int_to_ptr.vmem [resolvable:$true] %s334
      %337 = dma.vmem_to_hbm [thread:$0]  %s335, 128, %s7, [#allocation3]
    $region33: #{simple_deep_classifier.1} parent=1 // pred_fallthru
      _
    // Predicated region
    $region34: #{simple_deep_classifier.1} parent=1 // pred_check
      _
    $region35: #{simple_deep_classifier.1} parent=1 // pred_check_branch
      %339 = sbr.rel (0) target = $region37
    $region36: #{simple_deep_classifier.1} parent=1 // pred_region
      %340 = dma.done [#allocation3], 128
    $region37: #{simple_deep_classifier.1} parent=1 // pred_fallthru
      _
    %341 = vsyncpa [#allocation3], 1

</llo_original>
